<compile_context>
chip_gen: v5e
topology: v5e:2x2
jax: 0.10.0
libtpu: 0.0.40
codegen_flags: <defaults>
</compile_context>

<pallas_src>
import functools

import jax
import jax.numpy as jnp
from jax.experimental import pallas as pl
from jax.experimental.pallas import tpu as pltpu


# ---------------------------------------------------------------------------
# Parameter / buffer construction (deterministic, mirrors the PyTorch module)
# ---------------------------------------------------------------------------
def build_embedding(max_steps: int) -> jnp.ndarray:
    """Replicates DiffusionEmbedding._build_embedding -> (max_steps, 128)."""
    steps = jnp.arange(max_steps, dtype=jnp.float32)[:, None]        # (T, 1)
    dims = jnp.arange(64, dtype=jnp.float32)[None, :]                 # (1, 64)
    table = steps * 10.0 ** (dims * 4.0 / 63.0)                       # (T, 64)
    return jnp.concatenate([jnp.sin(table), jnp.cos(table)], axis=1)  # (T, 128)


def init_params(key):
    """nn.Linear default init: U(-1/sqrt(fan_in), 1/sqrt(fan_in)); W stored (in, out)."""
    k1, k2, k3, k4 = jax.random.split(key, 4)
    bound1 = 1.0 / (128.0 ** 0.5)
    w1 = jax.random.uniform(k1, (128, 512), jnp.float32, -bound1, bound1)
    b1 = jax.random.uniform(k2, (1, 512), jnp.float32, -bound1, bound1)
    bound2 = 1.0 / (512.0 ** 0.5)
    w2 = jax.random.uniform(k3, (512, 512), jnp.float32, -bound2, bound2)
    b2 = jax.random.uniform(k4, (1, 512), jnp.float32, -bound2, bound2)
    return w1, b1, w2, b2


def prepare_params(embedding, w1, b1, w2, b2):
    """ONE-TIME prep (call outside the sampling loop, not per step).

    - casts w1/w2 to bf16 once (halves the dominant weight DMA; no per-call convert),
    - pads the embedding table rows to a multiple of 8 (sublane alignment for the
      in-kernel W @ table dot); padded rows are never selected,
    - normalizes bias shapes to (1, 512) f32.
    """
    T = int(embedding.shape[0])
    t_pad = ((T + 7) // 8) * 8
    table = jnp.zeros((t_pad, 128), jnp.float32).at[:T].set(embedding.astype(jnp.float32))
    return (table,
            w1.astype(jnp.bfloat16),
            b1.astype(jnp.float32).reshape(1, -1),
            w2.astype(jnp.bfloat16),
            b2.astype(jnp.float32).reshape(1, -1))


# ---------------------------------------------------------------------------
# Pallas kernel:
#   floor/ceil/frac + gather-lerp (as one small MXU dot)
#   + Linear(128->512) + SiLU + Linear(512->512) + SiLU
# ---------------------------------------------------------------------------
def _diffusion_embedding_kernel(t_ref, table_ref, w1_ref, b1_ref, w2_hbm_ref, b2_ref,
                                o_ref,                      # output (B,512)
                                w2_vmem, w2_sem,            # scratch: bf16 w2 buffer + DMA sem
                                *, max_steps: int):
    # Kick off the dominant (512 KB) w2 HBM->VMEM DMA immediately; it overlaps the
    # gather/lerp, projection1 and SiLU below.  We only wait right before the 2nd dot.
    w2_copy = pltpu.make_async_copy(w2_hbm_ref, w2_vmem, w2_sem)
    w2_copy.start()

    B = o_ref.shape[0]
    t_pad = table_ref.shape[0]

    # floor/ceil/frac of the (possibly fractional) diffusion step (all VPU work).
    # Integer steps arrive as exact floats -> frac == 0 -> plain table lookup.
    # NOTE: inputs are assumed in [0, max_steps-1]; out-of-range steps are clamped
    # (frac is computed pre-clamp, matching the PyTorch lerp for in-range inputs).
    t = t_ref[...]                                           # (B, 1) f32
    low_f = jnp.floor(t)
    frac = t - low_f
    low = jnp.clip(low_f.astype(jnp.int32), 0, max_steps - 1)           # (B, 1) i32
    high = jnp.clip(jnp.ceil(t).astype(jnp.int32), 0, max_steps - 1)    # (B, 1) i32

    # Gather + lerp as one tiny MXU dot: W[b,s] = (1-frac_b)*[s==low_b] + frac_b*[s==high_b]
    # (no per-row dynamic slices, no scratch round trip).  Padded table rows get weight 0.
    col = jax.lax.broadcasted_iota(jnp.int32, (B, t_pad), 1)
    W = (jnp.where(col == low, 1.0 - frac, 0.0)
         + jnp.where(col == high, frac, 0.0))                # (B, t_pad) f32
    x = jnp.dot(W, table_ref[...], preferred_element_type=jnp.float32)  # (B, 128) f32

    # projection1 + SiLU.  x stays f32 (free & tighter); w1 is bf16-for-DMA, upcast here.
    h = jnp.dot(x, w1_ref[...].astype(jnp.float32),
                preferred_element_type=jnp.float32) + b1_ref[...]
    h = h * jax.nn.sigmoid(h)                                # sigmoid -> EUP slot

    # projection2 + SiLU: wait for the overlapped w2 DMA only now.
    w2_copy.wait()
    o = jnp.dot(h.astype(jnp.bfloat16), w2_vmem[...],
                preferred_element_type=jnp.float32) + b2_ref[...]
    o = o * jax.nn.sigmoid(o)

    o_ref[...] = o.astype(o_ref.dtype)


def diffusion_embedding(diffusion_step, table, w1, b1, w2, b2, max_steps,
                        out_dtype=jnp.float32):
    """Forward pass of DiffusionEmbedding.

    diffusion_step: (B,) int or float steps.
    table/w1/b1/w2/b2: outputs of prepare_params() (bf16 weights, padded f32 table).
    max_steps: the original (unpadded) table length.
    out_dtype: set to jnp.bfloat16 if the downstream FiLM projection consumes bf16.
    """
    assert w1.dtype == jnp.bfloat16 and w2.dtype == jnp.bfloat16, \
        "cast weights once via prepare_params(); do not cast per call"

    B = int(diffusion_step.shape[0])
    t_pad = int(table.shape[0])

    # Both the integer-lookup and float-lerp paths reduce to the same in-kernel
    # floor/ceil/frac computation on a float step (exact for integer steps).
    t = diffusion_step.astype(jnp.float32).reshape(B, 1)

    kernel = functools.partial(_diffusion_embedding_kernel, max_steps=int(max_steps))

    weight_bytes = 128 * 512 * 2 + 512 * 512 * 2 + 2 * 512 * 4
    io_bytes = t_pad * 128 * 4 + B * 4 + B * 512 * jnp.dtype(out_dtype).itemsize

    out = pl.pallas_call(
        kernel,
        out_shape=jax.ShapeDtypeStruct((B, 512), out_dtype),
        in_specs=[
            pl.BlockSpec(memory_space=pltpu.MemorySpace.VMEM),   # t      (B,1)     f32
            pl.BlockSpec(memory_space=pltpu.MemorySpace.VMEM),   # table  (Tpad,128) f32
            pl.BlockSpec(memory_space=pltpu.MemorySpace.VMEM),   # w1     (128,512) bf16
            pl.BlockSpec(memory_space=pltpu.MemorySpace.VMEM),   # b1     (1,512)   f32
            pl.BlockSpec(memory_space=pl.ANY),                   # w2     (512,512) bf16, HBM
            pl.BlockSpec(memory_space=pltpu.MemorySpace.VMEM),   # b2     (1,512)   f32
        ],
        out_specs=pl.BlockSpec(memory_space=pltpu.MemorySpace.VMEM),
        scratch_shapes=[
            pltpu.VMEM((512, 512), jnp.bfloat16),                # w2 landing buffer
            pltpu.SemaphoreType.DMA(()),                         # its completion sem
        ],
        cost_estimate=pl.CostEstimate(
            flops=2 * B * (t_pad * 128 + 128 * 512 + 512 * 512),
            transcendentals=2 * B * 512,
            bytes_accessed=weight_bytes + io_bytes,
        ),
    )(t, table, w1, b1, w2, b2)
    return out


# ---------------------------------------------------------------------------
# Pure-JAX reference for verification (f32 throughout)
# ---------------------------------------------------------------------------
def _silu(x):
    return x * jax.nn.sigmoid(x)


def reference(diffusion_step, embedding, w1, b1, w2, b2):
    if jnp.issubdtype(diffusion_step.dtype, jnp.integer):
        x = embedding[diffusion_step]
    else:
        t = diffusion_step.astype(jnp.float32)
        low_idx = jnp.floor(t).astype(jnp.int32)
        high_idx = jnp.ceil(t).astype(jnp.int32)
        low = embedding[low_idx]
        high = embedding[high_idx]
        x = low + (high - low) * (t - low_idx.astype(jnp.float32))[:, None]
    x = _silu(x @ w1 + b1[0])
    x = _silu(x @ w2 + b2[0])
    return x


if __name__ == "__main__":
    max_steps = 50
    key = jax.random.PRNGKey(0)
    k_params, _ = jax.random.split(key)
    w1, b1, w2, b2 = init_params(k_params)
    embedding = build_embedding(max_steps)            # (50, 128)

    # One-time prep (OUTSIDE the sampling loop): bf16 weights, padded f32 table.
    table_p, w1_b, b1_p, w2_b, b2_p = prepare_params(embedding, w1, b1, w2, b2)

    # Integer diffusion steps (direct table-lookup path)
    steps_int = jnp.array([3, 17], dtype=jnp.int32)            # batch = 2
    out_int = diffusion_embedding(steps_int, table_p, w1_b, b1_p, w2_b, b2_p, max_steps)
    jax.block_until_ready(out_int)

    # Float diffusion steps (lerp path)
    steps_f = jnp.array([2.3, 11.7], dtype=jnp.float32)
    out_f = diffusion_embedding(steps_f, table_p, w1_b, b1_p, w2_b, b2_p, max_steps)
    jax.block_until_ready(out_f)

    ref_int = reference(steps_int, embedding, w1, b1, w2, b2)
    ref_f = reference(steps_f, embedding, w1, b1, w2, b2)

    assert out_int.shape == (2, 512) and out_f.shape == (2, 512)
    # bf16 weights in the matmuls -> relaxed tolerance vs the f32 reference.
    assert jnp.allclose(out_int, ref_int, atol=3e-2, rtol=3e-2)
    assert jnp.allclose(out_f, ref_f, atol=3e-2, rtol=3e-2)

    print("KERNEL_OK")
</pallas_src>

<mosaic_0001>
module attributes {stable_mosaic.version = 11 : i64} {
  func.func @_diffusion_embedding_kernel(%arg0: memref<2x1xf32, #tpu.memory_space<vmem>>, %arg1: memref<56x128xf32, #tpu.memory_space<vmem>>, %arg2: memref<128x512xbf16, #tpu.memory_space<vmem>>, %arg3: memref<1x512xf32, #tpu.memory_space<vmem>>, %arg4: memref<512x512xbf16, #tpu.memory_space<any>>, %arg5: memref<1x512xf32, #tpu.memory_space<vmem>>, %arg6: memref<2x512xf32, #tpu.memory_space<vmem>>, %arg7: memref<512x512xbf16, #tpu.memory_space<vmem>>, %arg8: memref<!tpu.dma_semaphore, #tpu.memory_space<semaphore_mem>>) attributes {dimension_semantics = [], scalar_prefetch = 0 : i64, scratch_operands = 2 : i64, tpu.core_type = #tpu.core_type<tc>} {
    tpu.enqueue_dma source(%arg4 : memref<512x512xbf16, #tpu.memory_space<any>>) target(%arg7 : memref<512x512xbf16, #tpu.memory_space<vmem>>) target_semaphore(%arg8 : memref<!tpu.dma_semaphore, #tpu.memory_space<semaphore_mem>>)
    %c0 = arith.constant 0 : index
    %c0_0 = arith.constant 0 : index
    %0 = vector.load %arg0[%c0, %c0_0] : memref<2x1xf32, #tpu.memory_space<vmem>>, vector<2x1xf32>
    %1 = math.floor %0 : vector<2x1xf32>
    %2 = arith.subf %0, %1 : vector<2x1xf32>
    %3 = arith.fptosi %1 : vector<2x1xf32> to vector<2x1xi32>
    %c0_i32 = arith.constant 0 : i32
    %c49_i32 = arith.constant 49 : i32
    %4 = vector.broadcast %c0_i32 : i32 to vector<2x1xi32>
    %5 = arith.maxsi %4, %3 : vector<2x1xi32>
    %6 = vector.broadcast %c49_i32 : i32 to vector<2x1xi32>
    %7 = arith.minsi %6, %5 : vector<2x1xi32>
    %8 = math.ceil %0 : vector<2x1xf32>
    %9 = arith.fptosi %8 : vector<2x1xf32> to vector<2x1xi32>
    %c0_i32_1 = arith.constant 0 : i32
    %c49_i32_2 = arith.constant 49 : i32
    %10 = vector.broadcast %c0_i32_1 : i32 to vector<2x1xi32>
    %11 = arith.maxsi %10, %9 : vector<2x1xi32>
    %12 = vector.broadcast %c49_i32_2 : i32 to vector<2x1xi32>
    %13 = arith.minsi %12, %11 : vector<2x1xi32>
    %14 = tpu.iota {dimensions = array<i32: 1>} : vector<2x56xi32>
    %15 = vector.broadcast %7 : vector<2x1xi32> to vector<2x56xi32>
    %16 = arith.cmpi eq, %14, %15 : vector<2x56xi32>
    %cst = arith.constant 1.000000e+00 : f32
    %17 = vector.broadcast %cst : f32 to vector<2x1xf32>
    %18 = arith.subf %17, %2 : vector<2x1xf32>
    %cst_3 = arith.constant 0.000000e+00 : f32
    %19 = vector.shape_cast %18 : vector<2x1xf32> to vector<2x1xf32>
    %20 = vector.broadcast %19 : vector<2x1xf32> to vector<2x56xf32>
    %21 = vector.broadcast %cst_3 : f32 to vector<2x56xf32>
    %22 = arith.select %16, %20, %21 : vector<2x56xi1>, vector<2x56xf32>
    %23 = vector.broadcast %13 : vector<2x1xi32> to vector<2x56xi32>
    %24 = arith.cmpi eq, %14, %23 : vector<2x56xi32>
    %cst_4 = arith.constant 0.000000e+00 : f32
    %25 = vector.shape_cast %2 : vector<2x1xf32> to vector<2x1xf32>
    %26 = vector.broadcast %25 : vector<2x1xf32> to vector<2x56xf32>
    %27 = vector.broadcast %cst_4 : f32 to vector<2x56xf32>
    %28 = arith.select %24, %26, %27 : vector<2x56xi1>, vector<2x56xf32>
    %29 = arith.addf %22, %28 : vector<2x56xf32>
    %c0_5 = arith.constant 0 : index
    %c0_6 = arith.constant 0 : index
    %30 = vector.load %arg1[%c0_5, %c0_6] : memref<56x128xf32, #tpu.memory_space<vmem>>, vector<56x128xf32>
    %cst_7 = arith.constant dense<0.000000e+00> : vector<2x128xf32>
    %31 = tpu.matmul %29, %30, %cst_7 {dimension_numbers = #tpu.dot_dimension_numbers<[1], [0], [0], [1], [0, 0, 1, 1], [], []>} : vector<2x56xf32>, vector<56x128xf32>, vector<2x128xf32> -> vector<2x128xf32>
    %c0_8 = arith.constant 0 : index
    %c0_9 = arith.constant 0 : index
    %32 = vector.load %arg2[%c0_8, %c0_9] : memref<128x512xbf16, #tpu.memory_space<vmem>>, vector<128x512xbf16>
    %33 = arith.extf %32 : vector<128x512xbf16> to vector<128x512xf32>
    %cst_10 = arith.constant dense<0.000000e+00> : vector<2x512xf32>
    %34 = tpu.matmul %31, %33, %cst_10 {dimension_numbers = #tpu.dot_dimension_numbers<[1], [0], [0], [1], [0, 0, 1, 1], [], []>} : vector<2x128xf32>, vector<128x512xf32>, vector<2x512xf32> -> vector<2x512xf32>
    %c0_11 = arith.constant 0 : index
    %c0_12 = arith.constant 0 : index
    %35 = vector.load %arg3[%c0_11, %c0_12] : memref<1x512xf32, #tpu.memory_space<vmem>>, vector<1x512xf32>
    %36 = vector.broadcast %35 : vector<1x512xf32> to vector<2x512xf32>
    %37 = arith.addf %34, %36 : vector<2x512xf32>
    %38 = arith.negf %37 : vector<2x512xf32>
    %39 = math.exp %38 : vector<2x512xf32>
    %cst_13 = arith.constant 1.000000e+00 : f32
    %40 = vector.broadcast %cst_13 : f32 to vector<2x512xf32>
    %41 = arith.addf %40, %39 : vector<2x512xf32>
    %42 = arith.divf %40, %41 : vector<2x512xf32>
    %43 = arith.mulf %37, %42 : vector<2x512xf32>
    tpu.wait_dma2 semaphore(%arg8 : memref<!tpu.dma_semaphore, #tpu.memory_space<semaphore_mem>>) src(%arg4 : memref<512x512xbf16, #tpu.memory_space<any>>) dst(%arg7 : memref<512x512xbf16, #tpu.memory_space<vmem>>)
    %44 = arith.truncf %43 : vector<2x512xf32> to vector<2x512xbf16>
    %c0_14 = arith.constant 0 : index
    %c0_15 = arith.constant 0 : index
    %45 = vector.load %arg7[%c0_14, %c0_15] : memref<512x512xbf16, #tpu.memory_space<vmem>>, vector<512x512xbf16>
    %cst_16 = arith.constant dense<0.000000e+00> : vector<2x512xf32>
    %46 = tpu.matmul %44, %45, %cst_16 {dimension_numbers = #tpu.dot_dimension_numbers<[1], [0], [0], [1], [0, 0, 1, 1], [], []>} : vector<2x512xbf16>, vector<512x512xbf16>, vector<2x512xf32> -> vector<2x512xf32>
    %c0_17 = arith.constant 0 : index
    %c0_18 = arith.constant 0 : index
    %47 = vector.load %arg5[%c0_17, %c0_18] : memref<1x512xf32, #tpu.memory_space<vmem>>, vector<1x512xf32>
    %48 = vector.broadcast %47 : vector<1x512xf32> to vector<2x512xf32>
    %49 = arith.addf %46, %48 : vector<2x512xf32>
    %50 = arith.negf %49 : vector<2x512xf32>
    %51 = math.exp %50 : vector<2x512xf32>
    %cst_19 = arith.constant 1.000000e+00 : f32
    %52 = vector.broadcast %cst_19 : f32 to vector<2x512xf32>
    %53 = arith.addf %52, %51 : vector<2x512xf32>
    %54 = arith.divf %52, %53 : vector<2x512xf32>
    %55 = arith.mulf %49, %54 : vector<2x512xf32>
    %c0_20 = arith.constant 0 : index
    %c0_21 = arith.constant 0 : index
    %56 = vector.load %arg6[%c0_20, %c0_21] : memref<2x512xf32, #tpu.memory_space<vmem>>, vector<2x512xf32>
    tpu.vector_store %arg6[%c0_20, %c0_21], %55 {strides = array<i32>} : memref<2x512xf32, #tpu.memory_space<vmem>>, vector<2x512xf32>,
    return
  }
}

</mosaic_0001>

<llo_original>
// kernel: tpu_custom_call.1
$region0: #{tpu_custom_call.1}
  #allocation0 [shape = 'u32[]', space=smem, size = 0x4, offset = 0x4, fixed_abs, tag = 'smem constant byte address 0x4 - core index']
  #allocation1 [shape = 'u32[72,128]{1,0:T(1,128)}', space=vmem, size = 0x9000, scoped, tag = 'internal scratch']
  #allocation2 [shape = 'bf16[512,512]{1,0:T(8,128)(2,1)}', space=vmem, size = 0x80000, scoped, tag = 'scratch operand']
  #allocation3 [shape = 's32[1]{0}', space=sflag, size = 0x4, scoped, tag = 'scratch operand']
  #allocation11 [shape = 's32[]', space=sflag, size = 0x4, offset = 0, fixed_abs, tag = 'sflag constant byte address 0x0 - dummy sync flag']
  #allocation12 [shape = 's32[]', space=sflag, size = 0x4, offset = 0, fixed_abs, tag = 'sflag constant byte address 0x0 - dummy sync flag']
  #allocation13 [shape = 'u32[]', space=smem, size = 0x4, offset = 0x44, fixed_abs, tag = 'smem constant byte address 0x44 - assertion arg 0']
  #allocation14 [shape = 'u32[]', space=smem, size = 0x4, offset = 0x48, fixed_abs, tag = 'smem constant byte address 0x48 - assertion arg 1']
  %s0 = inlined_call_operand.vmem [shape: f32[2,1], index: 0, kind: input, shape index: {}]
  %s1 = inlined_call_operand.hbm [shape: f32[56,128], index: 1, kind: input, shape index: {}]
  %s2 = inlined_call_operand.hbm [shape: bf16[128,512], index: 2, kind: input, shape index: {}]
  %s3 = inlined_call_operand.vmem [shape: f32[1,512], index: 3, kind: input, shape index: {}]
  %s4 = inlined_call_operand.hbm [shape: bf16[512,512], index: 4, kind: input, shape index: {}]
  %s5 = inlined_call_operand.hbm [shape: f32[1,512], index: 5, kind: input, shape index: {}]
  %s6 = inlined_call_operand.hbm [shape: f32[2,512], index: 6, kind: output, shape index: {}]
  %s7 = sld [smem:[#allocation0]]
  $region46: #{tpu_custom_call.1} parent=0
    _
  %s9 = ssub.s32 1, %s7
  %s10 = scalar_select 0, %s9, %s7
  $region1: #{tpu_custom_call.1} parent=0
    #allocation4 [shape = 'u8[28672]{0}', space=vmem, size = 0x7000, scoped, tag = 'input window, operand 1, single buffered']
    #allocation5 [shape = 's32[1]{0}', space=sflag, size = 0x4, scoped, tag = 'scoped memory for tpu_custom_call.1']
    #allocation6 [shape = 's32[1]{0}', space=sflag, size = 0x4, scoped, tag = 'scoped memory for tpu_custom_call.1']
    #allocation7 [shape = 'u8[131072]{0}', space=vmem, size = 0x20000, scoped, tag = 'input window, operand 2, single buffered']
    #allocation8 [shape = 's32[1]{0}', space=sflag, size = 0x4, scoped, tag = 'scoped memory for tpu_custom_call.1']
    #allocation9 [shape = 'u8[2048]{0}', space=vmem, size = 0x800, scoped, tag = 'input window, operand 5, single buffered']
    #allocation10 [shape = 'u8[4096]{0}', space=vmem, size = 0x1000, scoped, tag = 'output window, operand 0, single buffered']
    %11 = vsyncpa [#allocation5], 0
    %12 = vsyncpa [#allocation8], 0
    %13 = vsyncpa [#allocation6], 0
    // Predicated region
    $region2: #{tpu_custom_call.1} parent=1 // pred_check
      _
    $region3: #{tpu_custom_call.1} parent=1 // pred_check_branch
      %15 = sbr.rel (0) target = $region5
    $region4: #{tpu_custom_call.1} parent=1 // pred_region
      _
    $region5: #{tpu_custom_call.1} parent=1 // pred_fallthru
      _
    // Predicated region
    $region6: #{tpu_custom_call.1} parent=1 // pred_check
      _
    $region7: #{tpu_custom_call.1} parent=1 // pred_check_branch
      %17 = sbr.rel (0) target = $region9
    $region8: #{tpu_custom_call.1} parent=1 // pred_region
      %19 = vsyncadd [#allocation5], 0
      %s20 = sshll.u32 %s1, 4
      %s21 = int_to_ptr.hbm [resolvable:$true] %s20
      %s22 = sshll.u32 [#allocation4], 4
      %s23 = int_to_ptr.vmem [resolvable:$true] %s22
      %28 = dma.hbm_to_vmem [thread:$0]  %s21, 896, %s23, [#allocation5], 128, 128, 8
    $region9: #{tpu_custom_call.1} parent=1 // pred_fallthru
      _
    // Predicated region
    $region10: #{tpu_custom_call.1} parent=1 // pred_check
      _
    $region11: #{tpu_custom_call.1} parent=1 // pred_check_branch
      %30 = sbr.rel (0) target = $region13
    $region12: #{tpu_custom_call.1} parent=1 // pred_region
      %32 = vsyncadd [#allocation8], 0
      %s33 = sshll.u32 %s2, 4
      %s34 = int_to_ptr.hbm [resolvable:$true] %s33
      %s35 = sshll.u32 [#allocation7], 4
      %s36 = int_to_ptr.vmem [resolvable:$true] %s35
      %41 = dma.hbm_to_vmem [thread:$0]  %s34, 4096, %s36, [#allocation8], 256, 256, 16
    $region13: #{tpu_custom_call.1} parent=1 // pred_fallthru
      _
    // Predicated region
    $region14: #{tpu_custom_call.1} parent=1 // pred_check
      _
    $region15: #{tpu_custom_call.1} parent=1 // pred_check_branch
      %43 = sbr.rel (0) target = $region17
    $region16: #{tpu_custom_call.1} parent=1 // pred_region
      _
    $region17: #{tpu_custom_call.1} parent=1 // pred_fallthru
      _
    // Predicated region
    $region18: #{tpu_custom_call.1} parent=1 // pred_check
      _
    $region19: #{tpu_custom_call.1} parent=1 // pred_check_branch
      %45 = sbr.rel (0) target = $region21
    $region20: #{tpu_custom_call.1} parent=1 // pred_region
      %47 = vsyncadd [#allocation8], 0
      %s49 = sshll.u32 %s5, 4
      %s50 = int_to_ptr.hbm [resolvable:$true] %s49
      %s51 = sshll.u32 [#allocation9], 4
      %s52 = int_to_ptr.vmem [resolvable:$true] %s51
      %54 = dma.hbm_to_vmem [thread:$0]  %s50, 64, %s52, [#allocation8]
    $region21: #{tpu_custom_call.1} parent=1 // pred_fallthru
      _
    // Predicated region
    $region22: #{tpu_custom_call.1} parent=1 // pred_check
      _
    $region23: #{tpu_custom_call.1} parent=1 // pred_check_branch
      %56 = sbr.rel (0) target = $region25
    $region24: #{tpu_custom_call.1} parent=1 // pred_region
      %58 = dma.done [#allocation5], 896
    $region25: #{tpu_custom_call.1} parent=1 // pred_fallthru
      _
    // Predicated region
    $region26: #{tpu_custom_call.1} parent=1 // pred_check
      _
    $region27: #{tpu_custom_call.1} parent=1 // pred_check_branch
      %60 = sbr.rel (0) target = $region29
    $region28: #{tpu_custom_call.1} parent=1 // pred_region
      %62 = dma.done [#allocation8], 4096
    $region29: #{tpu_custom_call.1} parent=1 // pred_fallthru
      _
    // Predicated region
    $region30: #{tpu_custom_call.1} parent=1 // pred_check
      _
    $region31: #{tpu_custom_call.1} parent=1 // pred_check_branch
      %64 = sbr.rel (0) target = $region33
    $region32: #{tpu_custom_call.1} parent=1 // pred_region
      %66 = dma.done [#allocation8], 64
    $region33: #{tpu_custom_call.1} parent=1 // pred_fallthru
      _
    // Predicated region
    $region34: #{tpu_custom_call.1} parent=1 // pred_check
      _
    $region35: #{tpu_custom_call.1} parent=1 // pred_check_branch
      %68 = sbr.rel target = $region37
    $region36: #{tpu_custom_call.1} parent=1 // pred_region
      %69 = sst [smem:[#allocation13]] [#allocation12]
      %70 = sst [smem:[#allocation14]] [#allocation11]
    $region37: #{tpu_custom_call.1} parent=1 // pred_fallthru
      _
    %72 = shalt.err (0)
    %s74 = sshll.u32 %s4, 4
    %s75 = int_to_ptr.hbm [resolvable:$true] %s74
    %s76 = sshll.u32 [#allocation2], 4
    %s77 = int_to_ptr.vmem [resolvable:$true] %s76
    %79 = dma.hbm_to_vmem [thread:$0]  %s75, 16384, %s77, [#allocation3]
    %v80 = vld [vmem:[%s0] sm:$0x3]
    %v81 = vfloor.f32 %v80
    %v82 = vsub.f32 %v80, %v81
    %v83 = vcvt.f32.s32.to.zero.pseudo %v81
    %vm84 = vcmp.gt.s32.totalorder %v83, 0
    %v85 = vsel %vm84, %v83, 0
    %vm86 = vcmp.lt.s32.totalorder %v85, 49
    %v87 = vsel %vm86, %v85, 49
    %v88 = vceil.f32 %v80
    %v89 = vcvt.f32.s32.to.zero.pseudo %v88
    %vm90 = vcmp.gt.s32.totalorder %v89, 0
    %v91 = vsel %vm90, %v89, 0
    %vm92 = vcmp.lt.s32.totalorder %v91, 49
    %v93 = vsel %vm92, %v91, 49
    %v94 = vlaneseq
    %v95 = vand.u32 %v94, 127
    %96 = vset.pattern.permute.xlu0 0
    %97 = vperm.xlu0 %96, %v87
    %v98 = vpop.permute.xlu0 %97
    %vm99 = vcmp.eq.s32.totalorder %v95, %v98
    %v100 = vsub.f32 1.0, %v82
    %102 = vset.pattern.permute.xlu0 0
    %103 = vperm.xlu0 %102, %v100
    %v104 = vpop.permute.xlu0 %103
    %v106 = vsel %vm99, %v104, 0.0
    %107 = vset.pattern.permute.xlu0 0
    %108 = vperm.xlu0 %107, %v93
    %v109 = vpop.permute.xlu0 %108
    %vm110 = vcmp.eq.s32.totalorder %v95, %v109
    %112 = vset.pattern.permute.xlu0 0
    %113 = vperm.xlu0 %112, %v82
    %v114 = vpop.permute.xlu0 %113
    %v116 = vsel %vm110, %v114, 0.0
    %v117 = vadd.f32 %v106, %v116
    %v118 = vld [vmem:[#allocation4] sm:$0xff]
    %v119 = vld [vmem:[#allocation4 + $0x8] sm:$0xff]
    %v120 = vld [vmem:[#allocation4 + $0x10] sm:$0xff]
    %v121 = vld [vmem:[#allocation4 + $0x18] sm:$0xff]
    %v122 = vld [vmem:[#allocation4 + $0x20] sm:$0xff]
    %v123 = vld [vmem:[#allocation4 + $0x28] sm:$0xff]
    %v124 = vld [vmem:[#allocation4 + $0x30] sm:$0xff]
    %vm125 = vcmask 457728
    %v127 = vsel %vm125, %v117, 0
    %129 = vmatpush.msra.mxu0 0.0
    %130 = vmatpush.msra.mxu0 0.0
    %131 = vmatpush.msra.mxu0 0.0
    %132 = vmatpush.msra.mxu0 0.0
    %133 = vmatpush.msra.mxu0 0.0
    %134 = vmatpush.msra.mxu0 0.0
    %135 = vmatpush.msra.mxu0 0.0
    %136 = vmatpush.msra.mxu0 0.0
    %137 = vmatpush.msra.mxu0 0.0
    %138 = vmatpush.msra.mxu0 %v124
    %139 = vmatpush.msra.mxu0 %v123
    %140 = vmatpush.msra.mxu0 %v122
    %141 = vmatpush.msra.mxu0 %v121
    %142 = vmatpush.msra.mxu0 %v120
    %143 = vmatpush.msra.mxu0 %v119
    %144 = vmatpush.msra.mxu0 %v118
    %145 = vmatmul.f32.gmra.mxu0 %v127
    %v146 = vpop.f32.mrf.mxu0
    %v147 = vadd.f32 0.0, %v146
    %148 = vdwg.mxu0
    %v149 = vld [vmem:[#allocation7] sm:$0xff]
    %v150 = vld [vmem:[#allocation7 + $0x8] sm:$0xff]
    %v151 = vld [vmem:[#allocation7 + $0x10] sm:$0xff]
    %v152 = vld [vmem:[#allocation7 + $0x18] sm:$0xff]
    %v153 = vld [vmem:[#allocation7 + $0x20] sm:$0xff]
    %v154 = vld [vmem:[#allocation7 + $0x28] sm:$0xff]
    %v155 = vld [vmem:[#allocation7 + $0x30] sm:$0xff]
    %v156 = vld [vmem:[#allocation7 + $0x38] sm:$0xff]
    %v157 = vld [vmem:[#allocation7 + $0x40] sm:$0xff]
    %v158 = vld [vmem:[#allocation7 + $0x48] sm:$0xff]
    %v159 = vld [vmem:[#allocation7 + $0x50] sm:$0xff]
    %v160 = vld [vmem:[#allocation7 + $0x58] sm:$0xff]
    %v161 = vld [vmem:[#allocation7 + $0x60] sm:$0xff]
    %v162 = vld [vmem:[#allocation7 + $0x68] sm:$0xff]
    %v163 = vld [vmem:[#allocation7 + $0x70] sm:$0xff]
    %v164 = vld [vmem:[#allocation7 + $0x78] sm:$0xff]
    %v165 = vld [vmem:[#allocation7 + $0x80] sm:$0xff]
    %v166 = vld [vmem:[#allocation7 + $0x88] sm:$0xff]
    %v167 = vld [vmem:[#allocation7 + $0x90] sm:$0xff]
    %v168 = vld [vmem:[#allocation7 + $0x98] sm:$0xff]
    %v169 = vld [vmem:[#allocation7 + $0xa0] sm:$0xff]
    %v170 = vld [vmem:[#allocation7 + $0xa8] sm:$0xff]
    %v171 = vld [vmem:[#allocation7 + $0xb0] sm:$0xff]
    %v172 = vld [vmem:[#allocation7 + $0xb8] sm:$0xff]
    %v173 = vld [vmem:[#allocation7 + $0xc0] sm:$0xff]
    %v174 = vld [vmem:[#allocation7 + $0xc8] sm:$0xff]
    %v175 = vld [vmem:[#allocation7 + $0xd0] sm:$0xff]
    %v176 = vld [vmem:[#allocation7 + $0xd8] sm:$0xff]
    %v177 = vld [vmem:[#allocation7 + $0xe0] sm:$0xff]
    %v178 = vld [vmem:[#allocation7 + $0xe8] sm:$0xff]
    %v179 = vld [vmem:[#allocation7 + $0xf0] sm:$0xff]
    %v180 = vld [vmem:[#allocation7 + $0xf8] sm:$0xff]
    %v181 = vunpack.c.l.bf16 %v149
    %v182 = vunpack.c.h.bf16 %v149
    %v183 = vunpack.c.l.bf16 %v150
    %v184 = vunpack.c.h.bf16 %v150
    %v185 = vunpack.c.l.bf16 %v151
    %v186 = vunpack.c.h.bf16 %v151
    %v187 = vunpack.c.l.bf16 %v152
    %v188 = vunpack.c.h.bf16 %v152
    %v189 = vunpack.c.l.bf16 %v153
    %v190 = vunpack.c.h.bf16 %v153
    %v191 = vunpack.c.l.bf16 %v154
    %v192 = vunpack.c.h.bf16 %v154
    %v193 = vunpack.c.l.bf16 %v155
    %v194 = vunpack.c.h.bf16 %v155
    %v195 = vunpack.c.l.bf16 %v156
    %v196 = vunpack.c.h.bf16 %v156
    %v197 = vunpack.c.l.bf16 %v157
    %v198 = vunpack.c.h.bf16 %v157
    %v199 = vunpack.c.l.bf16 %v158
    %v200 = vunpack.c.h.bf16 %v158
    %v201 = vunpack.c.l.bf16 %v159
    %v202 = vunpack.c.h.bf16 %v159
    %v203 = vunpack.c.l.bf16 %v160
    %v204 = vunpack.c.h.bf16 %v160
    %v205 = vunpack.c.l.bf16 %v161
    %v206 = vunpack.c.h.bf16 %v161
    %v207 = vunpack.c.l.bf16 %v162
    %v208 = vunpack.c.h.bf16 %v162
    %v209 = vunpack.c.l.bf16 %v163
    %v210 = vunpack.c.h.bf16 %v163
    %v211 = vunpack.c.l.bf16 %v164
    %v212 = vunpack.c.h.bf16 %v164
    %v213 = vunpack.c.l.bf16 %v165
    %v214 = vunpack.c.h.bf16 %v165
    %v215 = vunpack.c.l.bf16 %v166
    %v216 = vunpack.c.h.bf16 %v166
    %v217 = vunpack.c.l.bf16 %v167
    %v218 = vunpack.c.h.bf16 %v167
    %v219 = vunpack.c.l.bf16 %v168
    %v220 = vunpack.c.h.bf16 %v168
    %v221 = vunpack.c.l.bf16 %v169
    %v222 = vunpack.c.h.bf16 %v169
    %v223 = vunpack.c.l.bf16 %v170
    %v224 = vunpack.c.h.bf16 %v170
    %v225 = vunpack.c.l.bf16 %v171
    %v226 = vunpack.c.h.bf16 %v171
    %v227 = vunpack.c.l.bf16 %v172
    %v228 = vunpack.c.h.bf16 %v172
    %v229 = vunpack.c.l.bf16 %v173
    %v230 = vunpack.c.h.bf16 %v173
    %v231 = vunpack.c.l.bf16 %v174
    %v232 = vunpack.c.h.bf16 %v174
    %v233 = vunpack.c.l.bf16 %v175
    %v234 = vunpack.c.h.bf16 %v175
    %v235 = vunpack.c.l.bf16 %v176
    %v236 = vunpack.c.h.bf16 %v176
    %v237 = vunpack.c.l.bf16 %v177
    %v238 = vunpack.c.h.bf16 %v177
    %v239 = vunpack.c.l.bf16 %v178
    %v240 = vunpack.c.h.bf16 %v178
    %v241 = vunpack.c.l.bf16 %v179
    %v242 = vunpack.c.h.bf16 %v179
    %v243 = vunpack.c.l.bf16 %v180
    %v244 = vunpack.c.h.bf16 %v180
    %v245 = vld [vmem:[%s3] sm:$0xf]
    %v247 = vperm.slane %v245, 0
    %v248 = vperm.slane %v245, 1
    %v249 = vperm.slane %v245, 2
    %v250 = vperm.slane %v245, 3
    %255 = vmatpush.msra.mxu0 %v241
    %256 = vmatpush.msra.mxu0 %v237
    %257 = vmatpush.msra.mxu0 %v233
    %258 = vmatpush.msra.mxu0 %v229
    %259 = vmatpush.msra.mxu0 %v225
    %260 = vmatpush.msra.mxu0 %v221
    %261 = vmatpush.msra.mxu0 %v217
    %262 = vmatpush.msra.mxu0 %v213
    %263 = vmatpush.msra.mxu0 %v209
    %264 = vmatpush.msra.mxu0 %v205
    %265 = vmatpush.msra.mxu0 %v201
    %266 = vmatpush.msra.mxu0 %v197
    %267 = vmatpush.msra.mxu0 %v193
    %268 = vmatpush.msra.mxu0 %v189
    %269 = vmatpush.msra.mxu0 %v185
    %270 = vmatpush.msra.mxu0 %v181
    %271 = vmatmul.f32.gmra.mxu0 %v147
    %v272 = vpop.f32.mrf.mxu0
    %v273 = vadd.f32 %v247, %v272
    %274 = vdwg.mxu0
    %275 = vmatpush.msra.mxu0 %v242
    %276 = vmatpush.msra.mxu0 %v238
    %277 = vmatpush.msra.mxu0 %v234
    %278 = vmatpush.msra.mxu0 %v230
    %279 = vmatpush.msra.mxu0 %v226
    %280 = vmatpush.msra.mxu0 %v222
    %281 = vmatpush.msra.mxu0 %v218
    %282 = vmatpush.msra.mxu0 %v214
    %283 = vmatpush.msra.mxu0 %v210
    %284 = vmatpush.msra.mxu0 %v206
    %285 = vmatpush.msra.mxu0 %v202
    %286 = vmatpush.msra.mxu0 %v198
    %287 = vmatpush.msra.mxu0 %v194
    %288 = vmatpush.msra.mxu0 %v190
    %289 = vmatpush.msra.mxu0 %v186
    %290 = vmatpush.msra.mxu0 %v182
    %291 = vmatmul.f32.gmra.mxu0 %v147
    %v292 = vpop.f32.mrf.mxu0
    %v293 = vadd.f32 %v248, %v292
    %294 = vdwg.mxu0
    %295 = vmatpush.msra.mxu0 %v243
    %296 = vmatpush.msra.mxu0 %v239
    %297 = vmatpush.msra.mxu0 %v235
    %298 = vmatpush.msra.mxu0 %v231
    %299 = vmatpush.msra.mxu0 %v227
    %300 = vmatpush.msra.mxu0 %v223
    %301 = vmatpush.msra.mxu0 %v219
    %302 = vmatpush.msra.mxu0 %v215
    %303 = vmatpush.msra.mxu0 %v211
    %304 = vmatpush.msra.mxu0 %v207
    %305 = vmatpush.msra.mxu0 %v203
    %306 = vmatpush.msra.mxu0 %v199
    %307 = vmatpush.msra.mxu0 %v195
    %308 = vmatpush.msra.mxu0 %v191
    %309 = vmatpush.msra.mxu0 %v187
    %310 = vmatpush.msra.mxu0 %v183
    %311 = vmatmul.f32.gmra.mxu0 %v147
    %v312 = vpop.f32.mrf.mxu0
    %v313 = vadd.f32 %v249, %v312
    %314 = vdwg.mxu0
    %315 = vmatpush.msra.mxu0 %v244
    %316 = vmatpush.msra.mxu0 %v240
    %317 = vmatpush.msra.mxu0 %v236
    %318 = vmatpush.msra.mxu0 %v232
    %319 = vmatpush.msra.mxu0 %v228
    %320 = vmatpush.msra.mxu0 %v224
    %321 = vmatpush.msra.mxu0 %v220
    %322 = vmatpush.msra.mxu0 %v216
    %323 = vmatpush.msra.mxu0 %v212
    %324 = vmatpush.msra.mxu0 %v208
    %325 = vmatpush.msra.mxu0 %v204
    %326 = vmatpush.msra.mxu0 %v200
    %327 = vmatpush.msra.mxu0 %v196
    %328 = vmatpush.msra.mxu0 %v192
    %329 = vmatpush.msra.mxu0 %v188
    %330 = vmatpush.msra.mxu0 %v184
    %331 = vmatmul.f32.gmra.mxu0 %v147
    %v332 = vpop.f32.mrf.mxu0
    %v333 = vadd.f32 %v250, %v332
    %334 = vdwg.mxu0
    %v335 = vxor.u32 %v273, 2147483648
    %v336 = vxor.u32 %v293, 2147483648
    %v337 = vxor.u32 %v313, 2147483648
    %v338 = vxor.u32 %v333, 2147483648
    %v339 = vmul.f32 %v335, 1.442695
    %v340 = vpow.pop %v339
    %v341 = vmul.f32 %v336, 1.442695
    %v342 = vpow.pop %v341
    %v343 = vmul.f32 %v337, 1.442695
    %v344 = vpow.pop %v343
    %v345 = vmul.f32 %v338, 1.442695
    %v346 = vpow.pop %v345
    %v347 = vadd.f32 %v340, 1.0
    %v348 = vadd.f32 %v342, 1.0
    %v349 = vadd.f32 %v344, 1.0
    %v350 = vadd.f32 %v346, 1.0
    %v351 = vrcp.pop %v347
    %v352 = vmul.f32 %v347, %v351
    %v353 = vsub.f32 1.0, %v352
    %v354 = vmul.f32 %v351, %v353
    %v355 = vadd.f32 %v351, %v354
    %vm356 = vweird.f32 %v347
    %vm357 = vweird.f32 %v351
    %vm358 = vmor %vm356, %vm357
    %v359 = vsel %vm358, %v351, %v355
    %v360 = vand.u32 2147483647, %v347
    %vm361 = vcmp.eq.f32.partialorder %v360, 8.507059e+37
    %v362 = vand.u32 %v347, 2147483648
    %v363 = vor.u32 1.1754944e-38, %v362
    %v364 = vsel %vm361, %v363, %v359
    %v365 = vmul.f32 1.0, %v364
    %v366 = vrcp.pop %v348
    %v367 = vmul.f32 %v348, %v366
    %v368 = vsub.f32 1.0, %v367
    %v369 = vmul.f32 %v366, %v368
    %v370 = vadd.f32 %v366, %v369
    %vm371 = vweird.f32 %v348
    %vm372 = vweird.f32 %v366
    %vm373 = vmor %vm371, %vm372
    %v374 = vsel %vm373, %v366, %v370
    %v375 = vand.u32 2147483647, %v348
    %vm376 = vcmp.eq.f32.partialorder %v375, 8.507059e+37
    %v377 = vand.u32 %v348, 2147483648
    %v378 = vor.u32 1.1754944e-38, %v377
    %v379 = vsel %vm376, %v378, %v374
    %v380 = vmul.f32 1.0, %v379
    %v381 = vrcp.pop %v349
    %v382 = vmul.f32 %v349, %v381
    %v383 = vsub.f32 1.0, %v382
    %v384 = vmul.f32 %v381, %v383
    %v385 = vadd.f32 %v381, %v384
    %vm386 = vweird.f32 %v349
    %vm387 = vweird.f32 %v381
    %vm388 = vmor %vm386, %vm387
    %v389 = vsel %vm388, %v381, %v385
    %v390 = vand.u32 2147483647, %v349
    %vm391 = vcmp.eq.f32.partialorder %v390, 8.507059e+37
    %v392 = vand.u32 %v349, 2147483648
    %v393 = vor.u32 1.1754944e-38, %v392
    %v394 = vsel %vm391, %v393, %v389
    %v395 = vmul.f32 1.0, %v394
    %v396 = vrcp.pop %v350
    %v397 = vmul.f32 %v350, %v396
    %v398 = vsub.f32 1.0, %v397
    %v399 = vmul.f32 %v396, %v398
    %v400 = vadd.f32 %v396, %v399
    %vm401 = vweird.f32 %v350
    %vm402 = vweird.f32 %v396
    %vm403 = vmor %vm401, %vm402
    %v404 = vsel %vm403, %v396, %v400
    %v405 = vand.u32 2147483647, %v350
    %vm406 = vcmp.eq.f32.partialorder %v405, 8.507059e+37
    %v407 = vand.u32 %v350, 2147483648
    %v408 = vor.u32 1.1754944e-38, %v407
    %v409 = vsel %vm406, %v408, %v404
    %v410 = vmul.f32 1.0, %v409
    %v411 = vmul.f32 %v273, %v365
    %v412 = vmul.f32 %v293, %v380
    %v413 = vmul.f32 %v313, %v395
    %v414 = vmul.f32 %v333, %v410
    %s415 = smul.u32 4, 64
    %s416 = smul.u32 %s415, 4
    %s417 = sshll.u32 %s416, 4
    %418 = dma.done [#allocation3], %s417
    %v419 = vpack.c.bf16 %v411, %v411
    %v420 = vpack.c.bf16 %v412, %v412
    %v421 = vpack.c.bf16 %v413, %v413
    %v422 = vpack.c.bf16 %v414, %v414
    %v423 = vld [vmem:[#allocation2] sm:$0xff]
    %v424 = vld [vmem:[#allocation2 + $0x8] sm:$0xff]
    %v425 = vld [vmem:[#allocation2 + $0x10] sm:$0xff]
    %v426 = vld [vmem:[#allocation2 + $0x18] sm:$0xff]
    %v427 = vld [vmem:[#allocation2 + $0x20] sm:$0xff]
    %v428 = vld [vmem:[#allocation2 + $0x28] sm:$0xff]
    %v429 = vld [vmem:[#allocation2 + $0x30] sm:$0xff]
    %v430 = vld [vmem:[#allocation2 + $0x38] sm:$0xff]
    %v431 = vld [vmem:[#allocation2 + $0x40] sm:$0xff]
    %v432 = vld [vmem:[#allocation2 + $0x48] sm:$0xff]
    %v433 = vld [vmem:[#allocation2 + $0x50] sm:$0xff]
    %v434 = vld [vmem:[#allocation2 + $0x58] sm:$0xff]
    %v435 = vld [vmem:[#allocation2 + $0x60] sm:$0xff]
    %v436 = vld [vmem:[#allocation2 + $0x68] sm:$0xff]
    %v437 = vld [vmem:[#allocation2 + $0x70] sm:$0xff]
    %v438 = vld [vmem:[#allocation2 + $0x78] sm:$0xff]
    %v439 = vld [vmem:[#allocation2 + $0x80] sm:$0xff]
    %v440 = vld [vmem:[#allocation2 + $0x88] sm:$0xff]
    %v441 = vld [vmem:[#allocation2 + $0x90] sm:$0xff]
    %v442 = vld [vmem:[#allocation2 + $0x98] sm:$0xff]
    %v443 = vld [vmem:[#allocation2 + $0xa0] sm:$0xff]
    %v444 = vld [vmem:[#allocation2 + $0xa8] sm:$0xff]
    %v445 = vld [vmem:[#allocation2 + $0xb0] sm:$0xff]
    %v446 = vld [vmem:[#allocation2 + $0xb8] sm:$0xff]
    %v447 = vld [vmem:[#allocation2 + $0xc0] sm:$0xff]
    %v448 = vld [vmem:[#allocation2 + $0xc8] sm:$0xff]
    %v449 = vld [vmem:[#allocation2 + $0xd0] sm:$0xff]
    %v450 = vld [vmem:[#allocation2 + $0xd8] sm:$0xff]
    %v451 = vld [vmem:[#allocation2 + $0xe0] sm:$0xff]
    %v452 = vld [vmem:[#allocation2 + $0xe8] sm:$0xff]
    %v453 = vld [vmem:[#allocation2 + $0xf0] sm:$0xff]
    %v454 = vld [vmem:[#allocation2 + $0xf8] sm:$0xff]
    %v455 = vld [vmem:[#allocation2 + $0x100] sm:$0xff]
    %v456 = vld [vmem:[#allocation2 + $0x108] sm:$0xff]
    %v457 = vld [vmem:[#allocation2 + $0x110] sm:$0xff]
    %v458 = vld [vmem:[#allocation2 + $0x118] sm:$0xff]
    %v459 = vld [vmem:[#allocation2 + $0x120] sm:$0xff]
    %v460 = vld [vmem:[#allocation2 + $0x128] sm:$0xff]
    %v461 = vld [vmem:[#allocation2 + $0x130] sm:$0xff]
    %v462 = vld [vmem:[#allocation2 + $0x138] sm:$0xff]
    %v463 = vld [vmem:[#allocation2 + $0x140] sm:$0xff]
    %v464 = vld [vmem:[#allocation2 + $0x148] sm:$0xff]
    %v465 = vld [vmem:[#allocation2 + $0x150] sm:$0xff]
    %v466 = vld [vmem:[#allocation2 + $0x158] sm:$0xff]
    %v467 = vld [vmem:[#allocation2 + $0x160] sm:$0xff]
    %v468 = vld [vmem:[#allocation2 + $0x168] sm:$0xff]
    %v469 = vld [vmem:[#allocation2 + $0x170] sm:$0xff]
    %v470 = vld [vmem:[#allocation2 + $0x178] sm:$0xff]
    %v471 = vld [vmem:[#allocation2 + $0x180] sm:$0xff]
    %v472 = vld [vmem:[#allocation2 + $0x188] sm:$0xff]
    %v473 = vld [vmem:[#allocation2 + $0x190] sm:$0xff]
    %v474 = vld [vmem:[#allocation2 + $0x198] sm:$0xff]
    %v475 = vld [vmem:[#allocation2 + $0x1a0] sm:$0xff]
    %v476 = vld [vmem:[#allocation2 + $0x1a8] sm:$0xff]
    %v477 = vld [vmem:[#allocation2 + $0x1b0] sm:$0xff]
    %v478 = vld [vmem:[#allocation2 + $0x1b8] sm:$0xff]
    %v479 = vld [vmem:[#allocation2 + $0x1c0] sm:$0xff]
    %v480 = vld [vmem:[#allocation2 + $0x1c8] sm:$0xff]
    %v481 = vld [vmem:[#allocation2 + $0x1d0] sm:$0xff]
    %v482 = vld [vmem:[#allocation2 + $0x1d8] sm:$0xff]
    %v483 = vld [vmem:[#allocation2 + $0x1e0] sm:$0xff]
    %v484 = vld [vmem:[#allocation2 + $0x1e8] sm:$0xff]
    %v485 = vld [vmem:[#allocation2 + $0x1f0] sm:$0xff]
    %v486 = vld [vmem:[#allocation2 + $0x1f8] sm:$0xff]
    %v487 = vld [vmem:[#allocation2 + $0x200] sm:$0xff]
    %v488 = vld [vmem:[#allocation2 + $0x208] sm:$0xff]
    %v489 = vld [vmem:[#allocation2 + $0x210] sm:$0xff]
    %v490 = vld [vmem:[#allocation2 + $0x218] sm:$0xff]
    %v491 = vld [vmem:[#allocation2 + $0x220] sm:$0xff]
    %v492 = vld [vmem:[#allocation2 + $0x228] sm:$0xff]
    %v493 = vld [vmem:[#allocation2 + $0x230] sm:$0xff]
    %v494 = vld [vmem:[#allocation2 + $0x238] sm:$0xff]
    %v495 = vld [vmem:[#allocation2 + $0x240] sm:$0xff]
    %v496 = vld [vmem:[#allocation2 + $0x248] sm:$0xff]
    %v497 = vld [vmem:[#allocation2 + $0x250] sm:$0xff]
    %v498 = vld [vmem:[#allocation2 + $0x258] sm:$0xff]
    %v499 = vld [vmem:[#allocation2 + $0x260] sm:$0xff]
    %v500 = vld [vmem:[#allocation2 + $0x268] sm:$0xff]
    %v501 = vld [vmem:[#allocation2 + $0x270] sm:$0xff]
    %v502 = vld [vmem:[#allocation2 + $0x278] sm:$0xff]
    %v503 = vld [vmem:[#allocation2 + $0x280] sm:$0xff]
    %v504 = vld [vmem:[#allocation2 + $0x288] sm:$0xff]
    %v505 = vld [vmem:[#allocation2 + $0x290] sm:$0xff]
    %v506 = vld [vmem:[#allocation2 + $0x298] sm:$0xff]
    %v507 = vld [vmem:[#allocation2 + $0x2a0] sm:$0xff]
    %v508 = vld [vmem:[#allocation2 + $0x2a8] sm:$0xff]
    %v509 = vld [vmem:[#allocation2 + $0x2b0] sm:$0xff]
    %v510 = vld [vmem:[#allocation2 + $0x2b8] sm:$0xff]
    %v511 = vld [vmem:[#allocation2 + $0x2c0] sm:$0xff]
    %v512 = vld [vmem:[#allocation2 + $0x2c8] sm:$0xff]
    %v513 = vld [vmem:[#allocation2 + $0x2d0] sm:$0xff]
    %v514 = vld [vmem:[#allocation2 + $0x2d8] sm:$0xff]
    %v515 = vld [vmem:[#allocation2 + $0x2e0] sm:$0xff]
    %v516 = vld [vmem:[#allocation2 + $0x2e8] sm:$0xff]
    %v517 = vld [vmem:[#allocation2 + $0x2f0] sm:$0xff]
    %v518 = vld [vmem:[#allocation2 + $0x2f8] sm:$0xff]
    %v519 = vld [vmem:[#allocation2 + $0x300] sm:$0xff]
    %v520 = vld [vmem:[#allocation2 + $0x308] sm:$0xff]
    %v521 = vld [vmem:[#allocation2 + $0x310] sm:$0xff]
    %v522 = vld [vmem:[#allocation2 + $0x318] sm:$0xff]
    %v523 = vld [vmem:[#allocation2 + $0x320] sm:$0xff]
    %v524 = vld [vmem:[#allocation2 + $0x328] sm:$0xff]
    %v525 = vld [vmem:[#allocation2 + $0x330] sm:$0xff]
    %v526 = vld [vmem:[#allocation2 + $0x338] sm:$0xff]
    %v527 = vld [vmem:[#allocation2 + $0x340] sm:$0xff]
    %v528 = vld [vmem:[#allocation2 + $0x348] sm:$0xff]
    %v529 = vld [vmem:[#allocation2 + $0x350] sm:$0xff]
    %v530 = vld [vmem:[#allocation2 + $0x358] sm:$0xff]
    %v531 = vld [vmem:[#allocation2 + $0x360] sm:$0xff]
    %v532 = vld [vmem:[#allocation2 + $0x368] sm:$0xff]
    %v533 = vld [vmem:[#allocation2 + $0x370] sm:$0xff]
    %v534 = vld [vmem:[#allocation2 + $0x378] sm:$0xff]
    %v535 = vld [vmem:[#allocation2 + $0x380] sm:$0xff]
    %v536 = vld [vmem:[#allocation2 + $0x388] sm:$0xff]
    %v537 = vld [vmem:[#allocation2 + $0x390] sm:$0xff]
    %v538 = vld [vmem:[#allocation2 + $0x398] sm:$0xff]
    %v539 = vld [vmem:[#allocation2 + $0x3a0] sm:$0xff]
    %v540 = vld [vmem:[#allocation2 + $0x3a8] sm:$0xff]
    %v541 = vld [vmem:[#allocation2 + $0x3b0] sm:$0xff]
    %v542 = vld [vmem:[#allocation2 + $0x3b8] sm:$0xff]
    %v543 = vld [vmem:[#allocation2 + $0x3c0] sm:$0xff]
    %v544 = vld [vmem:[#allocation2 + $0x3c8] sm:$0xff]
    %v545 = vld [vmem:[#allocation2 + $0x3d0] sm:$0xff]
    %v546 = vld [vmem:[#allocation2 + $0x3d8] sm:$0xff]
    %v547 = vld [vmem:[#allocation2 + $0x3e0] sm:$0xff]
    %v548 = vld [vmem:[#allocation2 + $0x3e8] sm:$0xff]
    %v549 = vld [vmem:[#allocation2 + $0x3f0] sm:$0xff]
    %v550 = vld [vmem:[#allocation2 + $0x3f8] sm:$0xff]
    %v551 = vld [vmem:[#allocation9] sm:$0xf]
    %v553 = vperm.slane %v551, 0
    %v554 = vperm.slane %v551, 1
    %v555 = vperm.slane %v551, 2
    %v556 = vperm.slane %v551, 3
    %v689 = vunpack.c.l.b16 %v423
    %v690 = vunpack.c.h.b16 %v423
    %v691 = vunpack.c.l.b16 %v424
    %v692 = vunpack.c.h.b16 %v424
    %v693 = vunpack.c.l.b16 %v425
    %v694 = vunpack.c.h.b16 %v425
    %v695 = vunpack.c.l.b16 %v426
    %v696 = vunpack.c.h.b16 %v426
    %v697 = vunpack.c.l.b16 %v427
    %v698 = vunpack.c.h.b16 %v427
    %v699 = vunpack.c.l.b16 %v428
    %v700 = vunpack.c.h.b16 %v428
    %v701 = vunpack.c.l.b16 %v429
    %v702 = vunpack.c.h.b16 %v429
    %v703 = vunpack.c.l.b16 %v430
    %v704 = vunpack.c.h.b16 %v430
    %v705 = vunpack.c.l.b16 %v431
    %v706 = vunpack.c.h.b16 %v431
    %v707 = vunpack.c.l.b16 %v432
    %v708 = vunpack.c.h.b16 %v432
    %v709 = vunpack.c.l.b16 %v433
    %v710 = vunpack.c.h.b16 %v433
    %v711 = vunpack.c.l.b16 %v434
    %v712 = vunpack.c.h.b16 %v434
    %v713 = vunpack.c.l.b16 %v435
    %v714 = vunpack.c.h.b16 %v435
    %v715 = vunpack.c.l.b16 %v436
    %v716 = vunpack.c.h.b16 %v436
    %v717 = vunpack.c.l.b16 %v437
    %v718 = vunpack.c.h.b16 %v437
    %v719 = vunpack.c.l.b16 %v438
    %v720 = vunpack.c.h.b16 %v438
    %v721 = vunpack.c.l.b16 %v439
    %v722 = vunpack.c.h.b16 %v439
    %v723 = vunpack.c.l.b16 %v440
    %v724 = vunpack.c.h.b16 %v440
    %v725 = vunpack.c.l.b16 %v441
    %v726 = vunpack.c.h.b16 %v441
    %v727 = vunpack.c.l.b16 %v442
    %v728 = vunpack.c.h.b16 %v442
    %v729 = vunpack.c.l.b16 %v443
    %v730 = vunpack.c.h.b16 %v443
    %v731 = vunpack.c.l.b16 %v444
    %v732 = vunpack.c.h.b16 %v444
    %v733 = vunpack.c.l.b16 %v445
    %v734 = vunpack.c.h.b16 %v445
    %v735 = vunpack.c.l.b16 %v446
    %v736 = vunpack.c.h.b16 %v446
    %v737 = vunpack.c.l.b16 %v447
    %v738 = vunpack.c.h.b16 %v447
    %v739 = vunpack.c.l.b16 %v448
    %v740 = vunpack.c.h.b16 %v448
    %v741 = vunpack.c.l.b16 %v449
    %v742 = vunpack.c.h.b16 %v449
    %v743 = vunpack.c.l.b16 %v450
    %v744 = vunpack.c.h.b16 %v450
    %v745 = vunpack.c.l.b16 %v451
    %v746 = vunpack.c.h.b16 %v451
    %v747 = vunpack.c.l.b16 %v452
    %v748 = vunpack.c.h.b16 %v452
    %v749 = vunpack.c.l.b16 %v453
    %v750 = vunpack.c.h.b16 %v453
    %v751 = vunpack.c.l.b16 %v454
    %v752 = vunpack.c.h.b16 %v454
    %v753 = vunpack.c.l.b16 %v455
    %v754 = vunpack.c.h.b16 %v455
    %v755 = vunpack.c.l.b16 %v456
    %v756 = vunpack.c.h.b16 %v456
    %v757 = vunpack.c.l.b16 %v457
    %v758 = vunpack.c.h.b16 %v457
    %v759 = vunpack.c.l.b16 %v458
    %v760 = vunpack.c.h.b16 %v458
    %v761 = vunpack.c.l.b16 %v459
    %v762 = vunpack.c.h.b16 %v459
    %v763 = vunpack.c.l.b16 %v460
    %v764 = vunpack.c.h.b16 %v460
    %v765 = vunpack.c.l.b16 %v461
    %v766 = vunpack.c.h.b16 %v461
    %v767 = vunpack.c.l.b16 %v462
    %v768 = vunpack.c.h.b16 %v462
    %v769 = vunpack.c.l.b16 %v463
    %v770 = vunpack.c.h.b16 %v463
    %v771 = vunpack.c.l.b16 %v464
    %v772 = vunpack.c.h.b16 %v464
    %v773 = vunpack.c.l.b16 %v465
    %v774 = vunpack.c.h.b16 %v465
    %v775 = vunpack.c.l.b16 %v466
    %v776 = vunpack.c.h.b16 %v466
    %v777 = vunpack.c.l.b16 %v467
    %v778 = vunpack.c.h.b16 %v467
    %v779 = vunpack.c.l.b16 %v468
    %v780 = vunpack.c.h.b16 %v468
    %v781 = vunpack.c.l.b16 %v469
    %v782 = vunpack.c.h.b16 %v469
    %v783 = vunpack.c.l.b16 %v470
    %v784 = vunpack.c.h.b16 %v470
    %v785 = vunpack.c.l.b16 %v471
    %v786 = vunpack.c.h.b16 %v471
    %v787 = vunpack.c.l.b16 %v472
    %v788 = vunpack.c.h.b16 %v472
    %v789 = vunpack.c.l.b16 %v473
    %v790 = vunpack.c.h.b16 %v473
    %v791 = vunpack.c.l.b16 %v474
    %v792 = vunpack.c.h.b16 %v474
    %v793 = vunpack.c.l.b16 %v475
    %v794 = vunpack.c.h.b16 %v475
    %v795 = vunpack.c.l.b16 %v476
    %v796 = vunpack.c.h.b16 %v476
    %v797 = vunpack.c.l.b16 %v477
    %v798 = vunpack.c.h.b16 %v477
    %v799 = vunpack.c.l.b16 %v478
    %v800 = vunpack.c.h.b16 %v478
    %v801 = vunpack.c.l.b16 %v479
    %v802 = vunpack.c.h.b16 %v479
    %v803 = vunpack.c.l.b16 %v480
    %v804 = vunpack.c.h.b16 %v480
    %v805 = vunpack.c.l.b16 %v481
    %v806 = vunpack.c.h.b16 %v481
    %v807 = vunpack.c.l.b16 %v482
    %v808 = vunpack.c.h.b16 %v482
    %v809 = vunpack.c.l.b16 %v483
    %v810 = vunpack.c.h.b16 %v483
    %v811 = vunpack.c.l.b16 %v484
    %v812 = vunpack.c.h.b16 %v484
    %v813 = vunpack.c.l.b16 %v485
    %v814 = vunpack.c.h.b16 %v485
    %v815 = vunpack.c.l.b16 %v486
    %v816 = vunpack.c.h.b16 %v486
    %v817 = vunpack.c.l.b16 %v487
    %v818 = vunpack.c.h.b16 %v487
    %v819 = vunpack.c.l.b16 %v488
    %v820 = vunpack.c.h.b16 %v488
    %v821 = vunpack.c.l.b16 %v489
    %v822 = vunpack.c.h.b16 %v489
    %v823 = vunpack.c.l.b16 %v490
    %v824 = vunpack.c.h.b16 %v490
    %v825 = vunpack.c.l.b16 %v491
    %v826 = vunpack.c.h.b16 %v491
    %v827 = vunpack.c.l.b16 %v492
    %v828 = vunpack.c.h.b16 %v492
    %v829 = vunpack.c.l.b16 %v493
    %v830 = vunpack.c.h.b16 %v493
    %v831 = vunpack.c.l.b16 %v494
    %v832 = vunpack.c.h.b16 %v494
    %v833 = vunpack.c.l.b16 %v495
    %v834 = vunpack.c.h.b16 %v495
    %v835 = vunpack.c.l.b16 %v496
    %v836 = vunpack.c.h.b16 %v496
    %v837 = vunpack.c.l.b16 %v497
    %v838 = vunpack.c.h.b16 %v497
    %v839 = vunpack.c.l.b16 %v498
    %v840 = vunpack.c.h.b16 %v498
    %v841 = vunpack.c.l.b16 %v499
    %v842 = vunpack.c.h.b16 %v499
    %v843 = vunpack.c.l.b16 %v500
    %v844 = vunpack.c.h.b16 %v500
    %v845 = vunpack.c.l.b16 %v501
    %v846 = vunpack.c.h.b16 %v501
    %v847 = vunpack.c.l.b16 %v502
    %v848 = vunpack.c.h.b16 %v502
    %v849 = vunpack.c.l.b16 %v503
    %v850 = vunpack.c.h.b16 %v503
    %v851 = vunpack.c.l.b16 %v504
    %v852 = vunpack.c.h.b16 %v504
    %v853 = vunpack.c.l.b16 %v505
    %v854 = vunpack.c.h.b16 %v505
    %v855 = vunpack.c.l.b16 %v506
    %v856 = vunpack.c.h.b16 %v506
    %v857 = vunpack.c.l.b16 %v507
    %v858 = vunpack.c.h.b16 %v507
    %v859 = vunpack.c.l.b16 %v508
    %v860 = vunpack.c.h.b16 %v508
    %v861 = vunpack.c.l.b16 %v509
    %v862 = vunpack.c.h.b16 %v509
    %v863 = vunpack.c.l.b16 %v510
    %v864 = vunpack.c.h.b16 %v510
    %v865 = vunpack.c.l.b16 %v511
    %v866 = vunpack.c.h.b16 %v511
    %v867 = vunpack.c.l.b16 %v512
    %v868 = vunpack.c.h.b16 %v512
    %v869 = vunpack.c.l.b16 %v513
    %v870 = vunpack.c.h.b16 %v513
    %v871 = vunpack.c.l.b16 %v514
    %v872 = vunpack.c.h.b16 %v514
    %v873 = vunpack.c.l.b16 %v515
    %v874 = vunpack.c.h.b16 %v515
    %v875 = vunpack.c.l.b16 %v516
    %v876 = vunpack.c.h.b16 %v516
    %v877 = vunpack.c.l.b16 %v517
    %v878 = vunpack.c.h.b16 %v517
    %v879 = vunpack.c.l.b16 %v518
    %v880 = vunpack.c.h.b16 %v518
    %v881 = vunpack.c.l.b16 %v519
    %v882 = vunpack.c.h.b16 %v519
    %v883 = vunpack.c.l.b16 %v520
    %v884 = vunpack.c.h.b16 %v520
    %v885 = vunpack.c.l.b16 %v521
    %v886 = vunpack.c.h.b16 %v521
    %v887 = vunpack.c.l.b16 %v522
    %v888 = vunpack.c.h.b16 %v522
    %v889 = vunpack.c.l.b16 %v523
    %v890 = vunpack.c.h.b16 %v523
    %v891 = vunpack.c.l.b16 %v524
    %v892 = vunpack.c.h.b16 %v524
    %v893 = vunpack.c.l.b16 %v525
    %v894 = vunpack.c.h.b16 %v525
    %v895 = vunpack.c.l.b16 %v526
    %v896 = vunpack.c.h.b16 %v526
    %v897 = vunpack.c.l.b16 %v527
    %v898 = vunpack.c.h.b16 %v527
    %v899 = vunpack.c.l.b16 %v528
    %v900 = vunpack.c.h.b16 %v528
    %v901 = vunpack.c.l.b16 %v529
    %v902 = vunpack.c.h.b16 %v529
    %v903 = vunpack.c.l.b16 %v530
    %v904 = vunpack.c.h.b16 %v530
    %v905 = vunpack.c.l.b16 %v531
    %v906 = vunpack.c.h.b16 %v531
    %v907 = vunpack.c.l.b16 %v532
    %v908 = vunpack.c.h.b16 %v532
    %v909 = vunpack.c.l.b16 %v533
    %v910 = vunpack.c.h.b16 %v533
    %v911 = vunpack.c.l.b16 %v534
    %v912 = vunpack.c.h.b16 %v534
    %v913 = vunpack.c.l.b16 %v535
    %v914 = vunpack.c.h.b16 %v535
    %v915 = vunpack.c.l.b16 %v536
    %v916 = vunpack.c.h.b16 %v536
    %v917 = vunpack.c.l.b16 %v537
    %v918 = vunpack.c.h.b16 %v537
    %v919 = vunpack.c.l.b16 %v538
    %v920 = vunpack.c.h.b16 %v538
    %v921 = vunpack.c.l.b16 %v539
    %v922 = vunpack.c.h.b16 %v539
    %v923 = vunpack.c.l.b16 %v540
    %v924 = vunpack.c.h.b16 %v540
    %v925 = vunpack.c.l.b16 %v541
    %v926 = vunpack.c.h.b16 %v541
    %v927 = vunpack.c.l.b16 %v542
    %v928 = vunpack.c.h.b16 %v542
    %v929 = vunpack.c.l.b16 %v543
    %v930 = vunpack.c.h.b16 %v543
    %v931 = vunpack.c.l.b16 %v544
    %v932 = vunpack.c.h.b16 %v544
    %v933 = vunpack.c.l.b16 %v545
    %v934 = vunpack.c.h.b16 %v545
    %v935 = vunpack.c.l.b16 %v546
    %v936 = vunpack.c.h.b16 %v546
    %v937 = vunpack.c.l.b16 %v547
    %v938 = vunpack.c.h.b16 %v547
    %v939 = vunpack.c.l.b16 %v548
    %v940 = vunpack.c.h.b16 %v548
    %v941 = vunpack.c.l.b16 %v549
    %v942 = vunpack.c.h.b16 %v549
    %v943 = vunpack.c.l.b16 %v550
    %v944 = vunpack.c.h.b16 %v550
    %v945 = vpack.c.b16 %v693, %v689
    %v946 = vpack.c.b16 %v694, %v690
    %v947 = vpack.c.b16 %v695, %v691
    %v948 = vpack.c.b16 %v696, %v692
    %v949 = vpack.c.b16 %v701, %v697
    %v950 = vpack.c.b16 %v702, %v698
    %v951 = vpack.c.b16 %v703, %v699
    %v952 = vpack.c.b16 %v704, %v700
    %v953 = vpack.c.b16 %v709, %v705
    %v954 = vpack.c.b16 %v710, %v706
    %v955 = vpack.c.b16 %v711, %v707
    %v956 = vpack.c.b16 %v712, %v708
    %v957 = vpack.c.b16 %v717, %v713
    %v958 = vpack.c.b16 %v718, %v714
    %v959 = vpack.c.b16 %v719, %v715
    %v960 = vpack.c.b16 %v720, %v716
    %v961 = vpack.c.b16 %v725, %v721
    %v962 = vpack.c.b16 %v726, %v722
    %v963 = vpack.c.b16 %v727, %v723
    %v964 = vpack.c.b16 %v728, %v724
    %v965 = vpack.c.b16 %v733, %v729
    %v966 = vpack.c.b16 %v734, %v730
    %v967 = vpack.c.b16 %v735, %v731
    %v968 = vpack.c.b16 %v736, %v732
    %v969 = vpack.c.b16 %v741, %v737
    %v970 = vpack.c.b16 %v742, %v738
    %v971 = vpack.c.b16 %v743, %v739
    %v972 = vpack.c.b16 %v744, %v740
    %v973 = vpack.c.b16 %v749, %v745
    %v974 = vpack.c.b16 %v750, %v746
    %v975 = vpack.c.b16 %v751, %v747
    %v976 = vpack.c.b16 %v752, %v748
    %v977 = vpack.c.b16 %v757, %v753
    %v978 = vpack.c.b16 %v758, %v754
    %v979 = vpack.c.b16 %v759, %v755
    %v980 = vpack.c.b16 %v760, %v756
    %v981 = vpack.c.b16 %v765, %v761
    %v982 = vpack.c.b16 %v766, %v762
    %v983 = vpack.c.b16 %v767, %v763
    %v984 = vpack.c.b16 %v768, %v764
    %v985 = vpack.c.b16 %v773, %v769
    %v986 = vpack.c.b16 %v774, %v770
    %v987 = vpack.c.b16 %v775, %v771
    %v988 = vpack.c.b16 %v776, %v772
    %v989 = vpack.c.b16 %v781, %v777
    %v990 = vpack.c.b16 %v782, %v778
    %v991 = vpack.c.b16 %v783, %v779
    %v992 = vpack.c.b16 %v784, %v780
    %v993 = vpack.c.b16 %v789, %v785
    %v994 = vpack.c.b16 %v790, %v786
    %v995 = vpack.c.b16 %v791, %v787
    %v996 = vpack.c.b16 %v792, %v788
    %v997 = vpack.c.b16 %v797, %v793
    %v998 = vpack.c.b16 %v798, %v794
    %v999 = vpack.c.b16 %v799, %v795
    %v1000 = vpack.c.b16 %v800, %v796
    %v1001 = vpack.c.b16 %v805, %v801
    %v1002 = vpack.c.b16 %v806, %v802
    %v1003 = vpack.c.b16 %v807, %v803
    %v1004 = vpack.c.b16 %v808, %v804
    %v1005 = vpack.c.b16 %v813, %v809
    %v1006 = vpack.c.b16 %v814, %v810
    %v1007 = vpack.c.b16 %v815, %v811
    %v1008 = vpack.c.b16 %v816, %v812
    %v1009 = vpack.c.b16 %v821, %v817
    %v1010 = vpack.c.b16 %v822, %v818
    %v1011 = vpack.c.b16 %v823, %v819
    %v1012 = vpack.c.b16 %v824, %v820
    %v1013 = vpack.c.b16 %v829, %v825
    %v1014 = vpack.c.b16 %v830, %v826
    %v1015 = vpack.c.b16 %v831, %v827
    %v1016 = vpack.c.b16 %v832, %v828
    %v1017 = vpack.c.b16 %v837, %v833
    %v1018 = vpack.c.b16 %v838, %v834
    %v1019 = vpack.c.b16 %v839, %v835
    %v1020 = vpack.c.b16 %v840, %v836
    %v1021 = vpack.c.b16 %v845, %v841
    %v1022 = vpack.c.b16 %v846, %v842
    %v1023 = vpack.c.b16 %v847, %v843
    %v1024 = vpack.c.b16 %v848, %v844
    %v1025 = vpack.c.b16 %v853, %v849
    %v1026 = vpack.c.b16 %v854, %v850
    %v1027 = vpack.c.b16 %v855, %v851
    %v1028 = vpack.c.b16 %v856, %v852
    %v1029 = vpack.c.b16 %v861, %v857
    %v1030 = vpack.c.b16 %v862, %v858
    %v1031 = vpack.c.b16 %v863, %v859
    %v1032 = vpack.c.b16 %v864, %v860
    %v1033 = vpack.c.b16 %v869, %v865
    %v1034 = vpack.c.b16 %v870, %v866
    %v1035 = vpack.c.b16 %v871, %v867
    %v1036 = vpack.c.b16 %v872, %v868
    %v1037 = vpack.c.b16 %v877, %v873
    %v1038 = vpack.c.b16 %v878, %v874
    %v1039 = vpack.c.b16 %v879, %v875
    %v1040 = vpack.c.b16 %v880, %v876
    %v1041 = vpack.c.b16 %v885, %v881
    %v1042 = vpack.c.b16 %v886, %v882
    %v1043 = vpack.c.b16 %v887, %v883
    %v1044 = vpack.c.b16 %v888, %v884
    %v1045 = vpack.c.b16 %v893, %v889
    %v1046 = vpack.c.b16 %v894, %v890
    %v1047 = vpack.c.b16 %v895, %v891
    %v1048 = vpack.c.b16 %v896, %v892
    %v1049 = vpack.c.b16 %v901, %v897
    %v1050 = vpack.c.b16 %v902, %v898
    %v1051 = vpack.c.b16 %v903, %v899
    %v1052 = vpack.c.b16 %v904, %v900
    %v1053 = vpack.c.b16 %v909, %v905
    %v1054 = vpack.c.b16 %v910, %v906
    %v1055 = vpack.c.b16 %v911, %v907
    %v1056 = vpack.c.b16 %v912, %v908
    %v1057 = vpack.c.b16 %v917, %v913
    %v1058 = vpack.c.b16 %v918, %v914
    %v1059 = vpack.c.b16 %v919, %v915
    %v1060 = vpack.c.b16 %v920, %v916
    %v1061 = vpack.c.b16 %v925, %v921
    %v1062 = vpack.c.b16 %v926, %v922
    %v1063 = vpack.c.b16 %v927, %v923
    %v1064 = vpack.c.b16 %v928, %v924
    %v1065 = vpack.c.b16 %v933, %v929
    %v1066 = vpack.c.b16 %v934, %v930
    %v1067 = vpack.c.b16 %v935, %v931
    %v1068 = vpack.c.b16 %v936, %v932
    %v1069 = vpack.c.b16 %v941, %v937
    %v1070 = vpack.c.b16 %v942, %v938
    %v1071 = vpack.c.b16 %v943, %v939
    %v1072 = vpack.c.b16 %v944, %v940
    %1201 = vmatpush.bf16.msra.mxu0 %v973
    %1202 = vmatpush.bf16.msra.mxu0 %v969
    %1203 = vmatpush.bf16.msra.mxu0 %v965
    %1204 = vmatpush.bf16.msra.mxu0 %v961
    %1205 = vmatpush.bf16.msra.mxu0 %v957
    %1206 = vmatpush.bf16.msra.mxu0 %v953
    %1207 = vmatpush.bf16.msra.mxu0 %v949
    %1208 = vmatpush.bf16.msra.mxu0 %v945
    %1209 = vmatmul.bf16.gmra.mxu0 %v419
    %v1210 = vpop.f32.mrf.mxu0
    %v1211 = vadd.f32 %v553, %v1210
    %v1212 = vpop.f32.mrf.mxu0
    %1213 = vdwg.mxu0
    %1214 = vmatpush.bf16.msra.mxu0 %v1005
    %1215 = vmatpush.bf16.msra.mxu0 %v1001
    %1216 = vmatpush.bf16.msra.mxu0 %v997
    %1217 = vmatpush.bf16.msra.mxu0 %v993
    %1218 = vmatpush.bf16.msra.mxu0 %v989
    %1219 = vmatpush.bf16.msra.mxu0 %v985
    %1220 = vmatpush.bf16.msra.mxu0 %v981
    %1221 = vmatpush.bf16.msra.mxu0 %v977
    %1222 = vmatmul.bf16.gmra.mxu0 %v420
    %v1223 = vpop.f32.mrf.mxu0
    %v1224 = vadd.f32 %v1211, %v1223
    %v1225 = vpop.f32.mrf.mxu0
    %1226 = vdwg.mxu0
    %1227 = vmatpush.bf16.msra.mxu0 %v1037
    %1228 = vmatpush.bf16.msra.mxu0 %v1033
    %1229 = vmatpush.bf16.msra.mxu0 %v1029
    %1230 = vmatpush.bf16.msra.mxu0 %v1025
    %1231 = vmatpush.bf16.msra.mxu0 %v1021
    %1232 = vmatpush.bf16.msra.mxu0 %v1017
    %1233 = vmatpush.bf16.msra.mxu0 %v1013
    %1234 = vmatpush.bf16.msra.mxu0 %v1009
    %1235 = vmatmul.bf16.gmra.mxu0 %v421
    %v1236 = vpop.f32.mrf.mxu0
    %v1237 = vadd.f32 %v1224, %v1236
    %v1238 = vpop.f32.mrf.mxu0
    %1239 = vdwg.mxu0
    %1240 = vmatpush.bf16.msra.mxu0 %v1069
    %1241 = vmatpush.bf16.msra.mxu0 %v1065
    %1242 = vmatpush.bf16.msra.mxu0 %v1061
    %1243 = vmatpush.bf16.msra.mxu0 %v1057
    %1244 = vmatpush.bf16.msra.mxu0 %v1053
    %1245 = vmatpush.bf16.msra.mxu0 %v1049
    %1246 = vmatpush.bf16.msra.mxu0 %v1045
    %1247 = vmatpush.bf16.msra.mxu0 %v1041
    %1248 = vmatmul.bf16.gmra.mxu0 %v422
    %v1249 = vpop.f32.mrf.mxu0
    %v1250 = vadd.f32 %v1237, %v1249
    %v1251 = vpop.f32.mrf.mxu0
    %1252 = vdwg.mxu0
    %1253 = vmatpush.bf16.msra.mxu0 %v974
    %1254 = vmatpush.bf16.msra.mxu0 %v970
    %1255 = vmatpush.bf16.msra.mxu0 %v966
    %1256 = vmatpush.bf16.msra.mxu0 %v962
    %1257 = vmatpush.bf16.msra.mxu0 %v958
    %1258 = vmatpush.bf16.msra.mxu0 %v954
    %1259 = vmatpush.bf16.msra.mxu0 %v950
    %1260 = vmatpush.bf16.msra.mxu0 %v946
    %1261 = vmatmul.bf16.gmra.mxu0 %v419
    %v1262 = vpop.f32.mrf.mxu0
    %v1263 = vadd.f32 %v554, %v1262
    %v1264 = vpop.f32.mrf.mxu0
    %1265 = vdwg.mxu0
    %1266 = vmatpush.bf16.msra.mxu0 %v1006
    %1267 = vmatpush.bf16.msra.mxu0 %v1002
    %1268 = vmatpush.bf16.msra.mxu0 %v998
    %1269 = vmatpush.bf16.msra.mxu0 %v994
    %1270 = vmatpush.bf16.msra.mxu0 %v990
    %1271 = vmatpush.bf16.msra.mxu0 %v986
    %1272 = vmatpush.bf16.msra.mxu0 %v982
    %1273 = vmatpush.bf16.msra.mxu0 %v978
    %1274 = vmatmul.bf16.gmra.mxu0 %v420
    %v1275 = vpop.f32.mrf.mxu0
    %v1276 = vadd.f32 %v1263, %v1275
    %v1277 = vpop.f32.mrf.mxu0
    %1278 = vdwg.mxu0
    %1279 = vmatpush.bf16.msra.mxu0 %v1038
    %1280 = vmatpush.bf16.msra.mxu0 %v1034
    %1281 = vmatpush.bf16.msra.mxu0 %v1030
    %1282 = vmatpush.bf16.msra.mxu0 %v1026
    %1283 = vmatpush.bf16.msra.mxu0 %v1022
    %1284 = vmatpush.bf16.msra.mxu0 %v1018
    %1285 = vmatpush.bf16.msra.mxu0 %v1014
    %1286 = vmatpush.bf16.msra.mxu0 %v1010
    %1287 = vmatmul.bf16.gmra.mxu0 %v421
    %v1288 = vpop.f32.mrf.mxu0
    %v1289 = vadd.f32 %v1276, %v1288
    %v1290 = vpop.f32.mrf.mxu0
    %1291 = vdwg.mxu0
    %1292 = vmatpush.bf16.msra.mxu0 %v1070
    %1293 = vmatpush.bf16.msra.mxu0 %v1066
    %1294 = vmatpush.bf16.msra.mxu0 %v1062
    %1295 = vmatpush.bf16.msra.mxu0 %v1058
    %1296 = vmatpush.bf16.msra.mxu0 %v1054
    %1297 = vmatpush.bf16.msra.mxu0 %v1050
    %1298 = vmatpush.bf16.msra.mxu0 %v1046
    %1299 = vmatpush.bf16.msra.mxu0 %v1042
    %1300 = vmatmul.bf16.gmra.mxu0 %v422
    %v1301 = vpop.f32.mrf.mxu0
    %v1302 = vadd.f32 %v1289, %v1301
    %v1303 = vpop.f32.mrf.mxu0
    %1304 = vdwg.mxu0
    %1305 = vmatpush.bf16.msra.mxu0 %v975
    %1306 = vmatpush.bf16.msra.mxu0 %v971
    %1307 = vmatpush.bf16.msra.mxu0 %v967
    %1308 = vmatpush.bf16.msra.mxu0 %v963
    %1309 = vmatpush.bf16.msra.mxu0 %v959
    %1310 = vmatpush.bf16.msra.mxu0 %v955
    %1311 = vmatpush.bf16.msra.mxu0 %v951
    %1312 = vmatpush.bf16.msra.mxu0 %v947
    %1313 = vmatmul.bf16.gmra.mxu0 %v419
    %v1314 = vpop.f32.mrf.mxu0
    %v1315 = vadd.f32 %v555, %v1314
    %v1316 = vpop.f32.mrf.mxu0
    %1317 = vdwg.mxu0
    %1318 = vmatpush.bf16.msra.mxu0 %v1007
    %1319 = vmatpush.bf16.msra.mxu0 %v1003
    %1320 = vmatpush.bf16.msra.mxu0 %v999
    %1321 = vmatpush.bf16.msra.mxu0 %v995
    %1322 = vmatpush.bf16.msra.mxu0 %v991
    %1323 = vmatpush.bf16.msra.mxu0 %v987
    %1324 = vmatpush.bf16.msra.mxu0 %v983
    %1325 = vmatpush.bf16.msra.mxu0 %v979
    %1326 = vmatmul.bf16.gmra.mxu0 %v420
    %v1327 = vpop.f32.mrf.mxu0
    %v1328 = vadd.f32 %v1315, %v1327
    %v1329 = vpop.f32.mrf.mxu0
    %1330 = vdwg.mxu0
    %1331 = vmatpush.bf16.msra.mxu0 %v1039
    %1332 = vmatpush.bf16.msra.mxu0 %v1035
    %1333 = vmatpush.bf16.msra.mxu0 %v1031
    %1334 = vmatpush.bf16.msra.mxu0 %v1027
    %1335 = vmatpush.bf16.msra.mxu0 %v1023
    %1336 = vmatpush.bf16.msra.mxu0 %v1019
    %1337 = vmatpush.bf16.msra.mxu0 %v1015
    %1338 = vmatpush.bf16.msra.mxu0 %v1011
    %1339 = vmatmul.bf16.gmra.mxu0 %v421
    %v1340 = vpop.f32.mrf.mxu0
    %v1341 = vadd.f32 %v1328, %v1340
    %v1342 = vpop.f32.mrf.mxu0
    %1343 = vdwg.mxu0
    %1344 = vmatpush.bf16.msra.mxu0 %v1071
    %1345 = vmatpush.bf16.msra.mxu0 %v1067
    %1346 = vmatpush.bf16.msra.mxu0 %v1063
    %1347 = vmatpush.bf16.msra.mxu0 %v1059
    %1348 = vmatpush.bf16.msra.mxu0 %v1055
    %1349 = vmatpush.bf16.msra.mxu0 %v1051
    %1350 = vmatpush.bf16.msra.mxu0 %v1047
    %1351 = vmatpush.bf16.msra.mxu0 %v1043
    %1352 = vmatmul.bf16.gmra.mxu0 %v422
    %v1353 = vpop.f32.mrf.mxu0
    %v1354 = vadd.f32 %v1341, %v1353
    %v1355 = vpop.f32.mrf.mxu0
    %1356 = vdwg.mxu0
    %1357 = vmatpush.bf16.msra.mxu0 %v976
    %1358 = vmatpush.bf16.msra.mxu0 %v972
    %1359 = vmatpush.bf16.msra.mxu0 %v968
    %1360 = vmatpush.bf16.msra.mxu0 %v964
    %1361 = vmatpush.bf16.msra.mxu0 %v960
    %1362 = vmatpush.bf16.msra.mxu0 %v956
    %1363 = vmatpush.bf16.msra.mxu0 %v952
    %1364 = vmatpush.bf16.msra.mxu0 %v948
    %1365 = vmatmul.bf16.gmra.mxu0 %v419
    %v1366 = vpop.f32.mrf.mxu0
    %v1367 = vadd.f32 %v556, %v1366
    %v1368 = vpop.f32.mrf.mxu0
    %1369 = vdwg.mxu0
    %1370 = vmatpush.bf16.msra.mxu0 %v1008
    %1371 = vmatpush.bf16.msra.mxu0 %v1004
    %1372 = vmatpush.bf16.msra.mxu0 %v1000
    %1373 = vmatpush.bf16.msra.mxu0 %v996
    %1374 = vmatpush.bf16.msra.mxu0 %v992
    %1375 = vmatpush.bf16.msra.mxu0 %v988
    %1376 = vmatpush.bf16.msra.mxu0 %v984
    %1377 = vmatpush.bf16.msra.mxu0 %v980
    %1378 = vmatmul.bf16.gmra.mxu0 %v420
    %v1379 = vpop.f32.mrf.mxu0
    %v1380 = vadd.f32 %v1367, %v1379
    %v1381 = vpop.f32.mrf.mxu0
    %1382 = vdwg.mxu0
    %1383 = vmatpush.bf16.msra.mxu0 %v1040
    %1384 = vmatpush.bf16.msra.mxu0 %v1036
    %1385 = vmatpush.bf16.msra.mxu0 %v1032
    %1386 = vmatpush.bf16.msra.mxu0 %v1028
    %1387 = vmatpush.bf16.msra.mxu0 %v1024
    %1388 = vmatpush.bf16.msra.mxu0 %v1020
    %1389 = vmatpush.bf16.msra.mxu0 %v1016
    %1390 = vmatpush.bf16.msra.mxu0 %v1012
    %1391 = vmatmul.bf16.gmra.mxu0 %v421
    %v1392 = vpop.f32.mrf.mxu0
    %v1393 = vadd.f32 %v1380, %v1392
    %v1394 = vpop.f32.mrf.mxu0
    %1395 = vdwg.mxu0
    %1396 = vmatpush.bf16.msra.mxu0 %v1072
    %1397 = vmatpush.bf16.msra.mxu0 %v1068
    %1398 = vmatpush.bf16.msra.mxu0 %v1064
    %1399 = vmatpush.bf16.msra.mxu0 %v1060
    %1400 = vmatpush.bf16.msra.mxu0 %v1056
    %1401 = vmatpush.bf16.msra.mxu0 %v1052
    %1402 = vmatpush.bf16.msra.mxu0 %v1048
    %1403 = vmatpush.bf16.msra.mxu0 %v1044
    %1404 = vmatmul.bf16.gmra.mxu0 %v422
    %v1405 = vpop.f32.mrf.mxu0
    %v1406 = vadd.f32 %v1393, %v1405
    %v1407 = vpop.f32.mrf.mxu0
    %1408 = vdwg.mxu0
    %v1409 = vxor.u32 %v1250, 2147483648
    %v1410 = vxor.u32 %v1302, 2147483648
    %v1411 = vxor.u32 %v1354, 2147483648
    %v1412 = vxor.u32 %v1406, 2147483648
    %v1413 = vmul.f32 %v1409, 1.442695
    %v1414 = vpow.pop %v1413
    %v1415 = vmul.f32 %v1410, 1.442695
    %v1416 = vpow.pop %v1415
    %v1417 = vmul.f32 %v1411, 1.442695
    %v1418 = vpow.pop %v1417
    %v1419 = vmul.f32 %v1412, 1.442695
    %v1420 = vpow.pop %v1419
    %v1421 = vadd.f32 %v1414, 1.0
    %v1422 = vadd.f32 %v1416, 1.0
    %v1423 = vadd.f32 %v1418, 1.0
    %v1424 = vadd.f32 %v1420, 1.0
    %v1425 = vrcp.pop %v1421
    %v1426 = vmul.f32 %v1421, %v1425
    %v1427 = vsub.f32 1.0, %v1426
    %v1428 = vmul.f32 %v1425, %v1427
    %v1429 = vadd.f32 %v1425, %v1428
    %vm1430 = vweird.f32 %v1421
    %vm1431 = vweird.f32 %v1425
    %vm1432 = vmor %vm1430, %vm1431
    %v1433 = vsel %vm1432, %v1425, %v1429
    %v1434 = vand.u32 2147483647, %v1421
    %vm1435 = vcmp.eq.f32.partialorder %v1434, 8.507059e+37
    %v1436 = vand.u32 %v1421, 2147483648
    %v1437 = vor.u32 1.1754944e-38, %v1436
    %v1438 = vsel %vm1435, %v1437, %v1433
    %v1439 = vmul.f32 1.0, %v1438
    %v1440 = vrcp.pop %v1422
    %v1441 = vmul.f32 %v1422, %v1440
    %v1442 = vsub.f32 1.0, %v1441
    %v1443 = vmul.f32 %v1440, %v1442
    %v1444 = vadd.f32 %v1440, %v1443
    %vm1445 = vweird.f32 %v1422
    %vm1446 = vweird.f32 %v1440
    %vm1447 = vmor %vm1445, %vm1446
    %v1448 = vsel %vm1447, %v1440, %v1444
    %v1449 = vand.u32 2147483647, %v1422
    %vm1450 = vcmp.eq.f32.partialorder %v1449, 8.507059e+37
    %v1451 = vand.u32 %v1422, 2147483648
    %v1452 = vor.u32 1.1754944e-38, %v1451
    %v1453 = vsel %vm1450, %v1452, %v1448
    %v1454 = vmul.f32 1.0, %v1453
    %v1455 = vrcp.pop %v1423
    %v1456 = vmul.f32 %v1423, %v1455
    %v1457 = vsub.f32 1.0, %v1456
    %v1458 = vmul.f32 %v1455, %v1457
    %v1459 = vadd.f32 %v1455, %v1458
    %vm1460 = vweird.f32 %v1423
    %vm1461 = vweird.f32 %v1455
    %vm1462 = vmor %vm1460, %vm1461
    %v1463 = vsel %vm1462, %v1455, %v1459
    %v1464 = vand.u32 2147483647, %v1423
    %vm1465 = vcmp.eq.f32.partialorder %v1464, 8.507059e+37
    %v1466 = vand.u32 %v1423, 2147483648
    %v1467 = vor.u32 1.1754944e-38, %v1466
    %v1468 = vsel %vm1465, %v1467, %v1463
    %v1469 = vmul.f32 1.0, %v1468
    %v1470 = vrcp.pop %v1424
    %v1471 = vmul.f32 %v1424, %v1470
    %v1472 = vsub.f32 1.0, %v1471
    %v1473 = vmul.f32 %v1470, %v1472
    %v1474 = vadd.f32 %v1470, %v1473
    %vm1475 = vweird.f32 %v1424
    %vm1476 = vweird.f32 %v1470
    %vm1477 = vmor %vm1475, %vm1476
    %v1478 = vsel %vm1477, %v1470, %v1474
    %v1479 = vand.u32 2147483647, %v1424
    %vm1480 = vcmp.eq.f32.partialorder %v1479, 8.507059e+37
    %v1481 = vand.u32 %v1424, 2147483648
    %v1482 = vor.u32 1.1754944e-38, %v1481
    %v1483 = vsel %vm1480, %v1482, %v1478
    %v1484 = vmul.f32 1.0, %v1483
    %v1485 = vmul.f32 %v1250, %v1439
    %v1486 = vmul.f32 %v1302, %v1454
    %v1487 = vmul.f32 %v1354, %v1469
    %v1488 = vmul.f32 %v1406, %v1484
    %v1493 = vrot.slane %v1486, 6
    %v1494 = vrot.slane %v1487, 4
    %v1495 = vrot.slane %v1488, 2
    %vm1496 = vcmask 1041408
    %v1497 = vsel %vm1496, %v1485, %v1493
    %vm1498 = vcmask 1045508
    %v1499 = vsel %vm1498, %v1494, %v1495
    %vm1500 = vcmask 1043456
    %v1501 = vsel %vm1500, %v1497, %v1499
    %1503 = vst [vmem:[#allocation10] sm:$0xff] %v1501
    // Predicated region
    $region38: #{tpu_custom_call.1} parent=1 // pred_check
      _
    $region39: #{tpu_custom_call.1} parent=1 // pred_check_branch
      %1505 = sbr.rel (0) target = $region41
    $region40: #{tpu_custom_call.1} parent=1 // pred_region
      %1507 = vsyncadd [#allocation6], 0
      %s1509 = sshll.u32 [#allocation10], 4
      %s1510 = int_to_ptr.vmem [resolvable:$true] %s1509
      %s1511 = sshll.u32 %s6, 4
      %s1512 = int_to_ptr.hbm [resolvable:$true] %s1511
      %1514 = dma.vmem_to_hbm [thread:$0]  %s1510, 128, %s1512, [#allocation6]
    $region41: #{tpu_custom_call.1} parent=1 // pred_fallthru
      _
    // Predicated region
    $region42: #{tpu_custom_call.1} parent=1 // pred_check
      _
    $region43: #{tpu_custom_call.1} parent=1 // pred_check_branch
      %1516 = sbr.rel (0) target = $region45
    $region44: #{tpu_custom_call.1} parent=1 // pred_region
      %1518 = dma.done [#allocation6], 128
    $region45: #{tpu_custom_call.1} parent=1 // pred_fallthru
      _
    %1519 = vsyncpa [#allocation5], 1
    %1520 = vsyncpa [#allocation8], 1
    %1521 = vsyncpa [#allocation6], 1
  %1522 = vsyncmov [#allocation3]
  %s1523 = vpop.sfrf %1522
  %p1524 = scmp.eq.s32.totalorder %s1523, 0
  %p1525 = pneg %p1524
  %1527 = shalt.err (%p1525)

</llo_original>
